<compile_context>
chip_gen: v6e
topology: v6e:2x2x1
jax: 0.10.0
libtpu: 0.0.40
codegen_flags: <defaults>
</compile_context>

<pallas_src>
import functools

import jax
import jax.numpy as jnp
from jax.experimental import pallas as pl
from jax.experimental.pallas import tpu as pltpu


def _round_up(x: int, m: int) -> int:
    return (x + m - 1) // m * m


def _mlp_kernel(x_ref, w1_ref, b1_ref, w2_ref, b2_ref, o_ref):
    # relu on the input tile
    x = jnp.maximum(x_ref[...], 0.0)
    # hidden = relu(x @ W1 + b1)   -- b1 is (1, Hp), broadcasts over batch rows
    h = jnp.dot(x, w1_ref[...], preferred_element_type=jnp.float32)
    h = jnp.maximum(h + b1_ref[...], 0.0)
    # out = h @ W2 + b2
    o = jnp.dot(h, w2_ref[...], preferred_element_type=jnp.float32)
    o_ref[...] = (o + b2_ref[...]).astype(o_ref.dtype)


@functools.partial(jax.jit, static_argnames=("tile_b",))
def custom_network_forward(x, w1, b1, w2, b2, *, tile_b: int = 512):
    """Fused shallow-MLP forward pass as a single Pallas TPU kernel.

    x : [B, D_in] float32
    w1: [D_in, H] float32   (transposed vs. PyTorch's [H, D_in])
    b1: [H]    or [1, H]    float32
    w2: [H, D_out] float32
    b2: [D_out] or [1, D_out] float32
    returns: [B, D_out] float32
    """
    B, D_in = x.shape
    H = w1.shape[1]
    D_out = w2.shape[1]

    # ---- lane-dense padding of every feature dim to a multiple of 128 ----
    Dp = _round_up(D_in, 128)
    Hp = _round_up(H, 128)
    Op = _round_up(D_out, 128)

    # ---- batch tiling: big tiles, sublane-aligned, grid over batch ----
    tb = min(tile_b, _round_up(B, 8))
    tb = _round_up(tb, 8)
    Bp = _round_up(B, tb)

    f32 = jnp.float32
    xp = jnp.zeros((Bp, Dp), f32).at[:B, :D_in].set(x.astype(f32))
    w1p = jnp.zeros((Dp, Hp), f32).at[:D_in, :H].set(w1.astype(f32))
    b1p = jnp.zeros((1, Hp), f32).at[:, :H].set(jnp.reshape(b1, (1, H)).astype(f32))
    w2p = jnp.zeros((Hp, Op), f32).at[:H, :D_out].set(w2.astype(f32))
    b2p = jnp.zeros((1, Op), f32).at[:, :D_out].set(jnp.reshape(b2, (1, D_out)).astype(f32))

    grid = (Bp // tb,)

    # Advisory cost estimate so XLA schedules this call sensibly.
    cost = pl.CostEstimate(
        flops=2 * Bp * (Dp * Hp + Hp * Op),
        transcendentals=0,
        bytes_accessed=4 * (Bp * Dp + Dp * Hp + Hp + Hp * Op + Op + Bp * Op),
    )

    out_padded = pl.pallas_call(
        _mlp_kernel,
        out_shape=jax.ShapeDtypeStruct((Bp, Op), f32),
        grid=grid,
        in_specs=[
            # Activations: tiled over the batch grid axis.
            pl.BlockSpec((tb, Dp), lambda i: (i, 0)),
            # Weights / biases: constant index_map -> VMEM-resident, one DMA.
            pl.BlockSpec((Dp, Hp), lambda i: (0, 0)),
            pl.BlockSpec((1, Hp), lambda i: (0, 0)),
            pl.BlockSpec((Hp, Op), lambda i: (0, 0)),
            pl.BlockSpec((1, Op), lambda i: (0, 0)),
        ],
        out_specs=pl.BlockSpec((tb, Op), lambda i: (i, 0)),
        compiler_params=pltpu.CompilerParams(
            dimension_semantics=("parallel",),   # batch tiles shard across TCs
            vmem_limit_bytes=32 * 1024 * 1024,   # safe on v5e/v6e/v7x
        ),
        cost_estimate=cost,
    )(xp, w1p, b1p, w2p, b2p)

    # Strip batch/lane padding back to the logical shape.
    return out_padded[:B, :D_out]


def _reference_forward(x, w1, b1, w2, b2):
    x = jnp.maximum(x, 0.0)
    h = jnp.maximum(x @ w1 + jnp.reshape(b1, (1, -1)), 0.0)
    return h @ w2 + jnp.reshape(b2, (1, -1))


if __name__ == "__main__":
    # Small shapes consistent with a shallow (one-hidden-layer) network.
    # TODO(synk): the original module's __init__ is elided in the source; layer
    # sizes here are synthetic but the forward semantics match the spec.
    B, D_in, H, D_out = 8, 16, 32, 4

    key = jax.random.PRNGKey(0)
    kx, k1, kb1, k2, kb2 = jax.random.split(key, 5)

    x = jax.random.normal(kx, (B, D_in), dtype=jnp.float32)
    w1 = jax.random.normal(k1, (D_in, H), dtype=jnp.float32) * 0.1
    b1 = jax.random.normal(kb1, (1, H), dtype=jnp.float32) * 0.1
    w2 = jax.random.normal(k2, (H, D_out), dtype=jnp.float32) * 0.1
    b2 = jax.random.normal(kb2, (1, D_out), dtype=jnp.float32) * 0.1

    out = custom_network_forward(x, w1, b1, w2, b2)
    out = jax.block_until_ready(out)

    ref = _reference_forward(x, w1, b1, w2, b2)
    assert out.shape == (B, D_out)
    assert jnp.allclose(out, ref, atol=1e-5, rtol=1e-5), "mismatch vs reference"

    print("KERNEL_OK")
</pallas_src>

<mosaic_0001>
module attributes {stable_mosaic.version = 11 : i64} {
  func.func @_mlp_kernel(%arg0: i32, %arg1: memref<8x128xf32, #tpu.memory_space<vmem>>, %arg2: memref<128x128xf32, #tpu.memory_space<vmem>>, %arg3: memref<1x128xf32, #tpu.memory_space<vmem>>, %arg4: memref<128x128xf32, #tpu.memory_space<vmem>>, %arg5: memref<1x128xf32, #tpu.memory_space<vmem>>, %arg6: memref<8x128xf32, #tpu.memory_space<vmem>>) attributes {dimension_semantics = [#tpu.dimension_semantics<parallel>], iteration_bounds = array<i64: 1>, scalar_prefetch = 0 : i64, scratch_operands = 0 : i64, tpu.core_type = #tpu.core_type<tc>, window_params = [{transform_indices = @transform_0, window_bounds = array<i64: 8, 128>}, {pipeline_mode = #tpu.pipeline_mode<synchronous>, transform_indices = @transform_1, window_bounds = array<i64: 128, 128>}, {pipeline_mode = #tpu.pipeline_mode<synchronous>, transform_indices = @transform_2, window_bounds = array<i64: 1, 128>}, {pipeline_mode = #tpu.pipeline_mode<synchronous>, transform_indices = @transform_3, window_bounds = array<i64: 128, 128>}, {pipeline_mode = #tpu.pipeline_mode<synchronous>, transform_indices = @transform_4, window_bounds = array<i64: 1, 128>}, {transform_indices = @transform_5, window_bounds = array<i64: 8, 128>}]} {
    %c0 = arith.constant 0 : index
    %c0_0 = arith.constant 0 : index
    %0 = vector.load %arg1[%c0, %c0_0] : memref<8x128xf32, #tpu.memory_space<vmem>>, vector<8x128xf32>
    %cst = arith.constant 0.000000e+00 : f32
    %1 = vector.broadcast %cst : f32 to vector<8x128xf32>
    %2 = arith.maximumf %0, %1 : vector<8x128xf32>
    %c0_1 = arith.constant 0 : index
    %c0_2 = arith.constant 0 : index
    %3 = vector.load %arg2[%c0_1, %c0_2] : memref<128x128xf32, #tpu.memory_space<vmem>>, vector<128x128xf32>
    %cst_3 = arith.constant dense<0.000000e+00> : vector<8x128xf32>
    %4 = tpu.matmul %2, %3, %cst_3 {dimension_numbers = #tpu.dot_dimension_numbers<[1], [0], [0], [1], [0, 0, 1, 1], [], []>} : vector<8x128xf32>, vector<128x128xf32>, vector<8x128xf32> -> vector<8x128xf32>
    %c0_4 = arith.constant 0 : index
    %c0_5 = arith.constant 0 : index
    %5 = vector.load %arg3[%c0_4, %c0_5] : memref<1x128xf32, #tpu.memory_space<vmem>>, vector<1x128xf32>
    %6 = vector.broadcast %5 : vector<1x128xf32> to vector<8x128xf32>
    %7 = arith.addf %4, %6 : vector<8x128xf32>
    %cst_6 = arith.constant 0.000000e+00 : f32
    %8 = vector.broadcast %cst_6 : f32 to vector<8x128xf32>
    %9 = arith.maximumf %7, %8 : vector<8x128xf32>
    %c0_7 = arith.constant 0 : index
    %c0_8 = arith.constant 0 : index
    %10 = vector.load %arg4[%c0_7, %c0_8] : memref<128x128xf32, #tpu.memory_space<vmem>>, vector<128x128xf32>
    %cst_9 = arith.constant dense<0.000000e+00> : vector<8x128xf32>
    %11 = tpu.matmul %9, %10, %cst_9 {dimension_numbers = #tpu.dot_dimension_numbers<[1], [0], [0], [1], [0, 0, 1, 1], [], []>} : vector<8x128xf32>, vector<128x128xf32>, vector<8x128xf32> -> vector<8x128xf32>
    %c0_10 = arith.constant 0 : index
    %c0_11 = arith.constant 0 : index
    %12 = vector.load %arg5[%c0_10, %c0_11] : memref<1x128xf32, #tpu.memory_space<vmem>>, vector<1x128xf32>
    %13 = vector.broadcast %12 : vector<1x128xf32> to vector<8x128xf32>
    %14 = arith.addf %11, %13 : vector<8x128xf32>
    %c0_12 = arith.constant 0 : index
    %c0_13 = arith.constant 0 : index
    %15 = vector.load %arg6[%c0_12, %c0_13] : memref<8x128xf32, #tpu.memory_space<vmem>>, vector<8x128xf32>
    tpu.vector_store %arg6[%c0_12, %c0_13], %14 {strides = array<i32>} : memref<8x128xf32, #tpu.memory_space<vmem>>, vector<8x128xf32>,
    return
  }
  func.func @transform_0(%arg0: i32) -> (i32, i32) {
    %c0_i32 = arith.constant 0 : i32
    %c0_i32_0 = arith.constant 0 : i32
    return %arg0, %c0_i32 : i32, i32
  }
  func.func @transform_1(%arg0: i32) -> (i32, i32) {
    %c0_i32 = arith.constant 0 : i32
    %c0_i32_0 = arith.constant 0 : i32
    %c0_i32_1 = arith.constant 0 : i32
    return %c0_i32, %c0_i32_0 : i32, i32
  }
  func.func @transform_2(%arg0: i32) -> (i32, i32) {
    %c0_i32 = arith.constant 0 : i32
    %c0_i32_0 = arith.constant 0 : i32
    %c0_i32_1 = arith.constant 0 : i32
    return %c0_i32, %c0_i32_0 : i32, i32
  }
  func.func @transform_3(%arg0: i32) -> (i32, i32) {
    %c0_i32 = arith.constant 0 : i32
    %c0_i32_0 = arith.constant 0 : i32
    %c0_i32_1 = arith.constant 0 : i32
    return %c0_i32, %c0_i32_0 : i32, i32
  }
  func.func @transform_4(%arg0: i32) -> (i32, i32) {
    %c0_i32 = arith.constant 0 : i32
    %c0_i32_0 = arith.constant 0 : i32
    %c0_i32_1 = arith.constant 0 : i32
    return %c0_i32, %c0_i32_0 : i32, i32
  }
  func.func @transform_5(%arg0: i32) -> (i32, i32) {
    %c0_i32 = arith.constant 0 : i32
    %c0_i32_0 = arith.constant 0 : i32
    return %arg0, %c0_i32 : i32, i32
  }
}

</mosaic_0001>

<llo_original>
// kernel: custom_network_forward.1
$region0: #{custom_network_forward.1}
  #allocation0 [shape = 'u32[]', space=smem, size = 0x4, offset = 0x4, fixed_abs, tag = 'smem constant byte address 0x4 - core index']
  #allocation1 [shape = 'u32[144,128]{1,0:T(1,128)}', space=vmem, size = 0x12000, scoped, tag = 'internal scratch']
  %s0 = inlined_call_operand.vmem [shape: f32[8,128], index: 0, kind: input, shape index: {}]
  %s1 = inlined_call_operand.vmem [shape: f32[128,128], index: 1, kind: input, shape index: {}]
  %s2 = inlined_call_operand.vmem [shape: f32[1,128], index: 2, kind: input, shape index: {}]
  %s3 = inlined_call_operand.vmem [shape: f32[128,128], index: 3, kind: input, shape index: {}]
  %s4 = inlined_call_operand.vmem [shape: f32[1,128], index: 4, kind: input, shape index: {}]
  %s5 = inlined_call_operand.vmem [shape: f32[8,128], index: 5, kind: output, shape index: {}]
  %s6 = sld [smem:[#allocation0]]
  $region30: #{custom_network_forward.1} parent=0
    _
  %s8 = ssub.s32 1, %s6
  %s9 = scalar_select 0, %s8, %s6
  // Predicated region
  $region2: #{custom_network_forward.1} parent=0 // pred_check
    _
  $region3: #{custom_network_forward.1} parent=0 // pred_check_branch
    %11 = sbr.rel (0) target = $region5
  $region4: #{custom_network_forward.1} parent=0 // pred_region
    _
  $region5: #{custom_network_forward.1} parent=0 // pred_fallthru
    _
  // Predicated region
  $region6: #{custom_network_forward.1} parent=0 // pred_check
    _
  $region7: #{custom_network_forward.1} parent=0 // pred_check_branch
    %13 = sbr.rel (0) target = $region9
  $region8: #{custom_network_forward.1} parent=0 // pred_region
    _
  $region9: #{custom_network_forward.1} parent=0 // pred_fallthru
    _
  // Predicated region
  $region10: #{custom_network_forward.1} parent=0 // pred_check
    _
  $region11: #{custom_network_forward.1} parent=0 // pred_check_branch
    %15 = sbr.rel (0) target = $region13
  $region12: #{custom_network_forward.1} parent=0 // pred_region
    _
  $region13: #{custom_network_forward.1} parent=0 // pred_fallthru
    _
  // Predicated region
  $region14: #{custom_network_forward.1} parent=0 // pred_check
    _
  $region15: #{custom_network_forward.1} parent=0 // pred_check_branch
    %17 = sbr.rel (0) target = $region17
  $region16: #{custom_network_forward.1} parent=0 // pred_region
    _
  $region17: #{custom_network_forward.1} parent=0 // pred_fallthru
    _
  // Predicated region
  $region18: #{custom_network_forward.1} parent=0 // pred_check
    _
  $region19: #{custom_network_forward.1} parent=0 // pred_check_branch
    %19 = sbr.rel (0) target = $region21
  $region20: #{custom_network_forward.1} parent=0 // pred_region
    _
  $region21: #{custom_network_forward.1} parent=0 // pred_fallthru
    _
  %v20 = vld [vmem:[%s0] sm:$0xff]
  %v21 = vmax.f32 %v20, 0.0
  %v22 = vld [vmem:[%s1] sm:$0xff]
  %v23 = vld [vmem:[%s1 + $0x8] sm:$0xff]
  %v24 = vld [vmem:[%s1 + $0x10] sm:$0xff]
  %v25 = vld [vmem:[%s1 + $0x18] sm:$0xff]
  %v26 = vld [vmem:[%s1 + $0x20] sm:$0xff]
  %v27 = vld [vmem:[%s1 + $0x28] sm:$0xff]
  %v28 = vld [vmem:[%s1 + $0x30] sm:$0xff]
  %v29 = vld [vmem:[%s1 + $0x38] sm:$0xff]
  %v30 = vld [vmem:[%s1 + $0x40] sm:$0xff]
  %v31 = vld [vmem:[%s1 + $0x48] sm:$0xff]
  %v32 = vld [vmem:[%s1 + $0x50] sm:$0xff]
  %v33 = vld [vmem:[%s1 + $0x58] sm:$0xff]
  %v34 = vld [vmem:[%s1 + $0x60] sm:$0xff]
  %v35 = vld [vmem:[%s1 + $0x68] sm:$0xff]
  %v36 = vld [vmem:[%s1 + $0x70] sm:$0xff]
  %v37 = vld [vmem:[%s1 + $0x78] sm:$0xff]
  %v38 = vld [vmem:[%s2] sm:$0x1]
  %v40 = vlaneseq
  %v41 = vshrl.u32 %v40, 7
  %v42 = vsub.s32 0, %v41
  %v43 = vrot.slane %v38, %v42
  %45 = vmatprep.subr.mxu0 0.0
  %46 = vmatpush1.msra.mxu0 %v37
  %47 = vmatprep.subr.mxu0 0.0
  %48 = vmatpush1.msra.mxu0 %v36
  %49 = vmatprep.subr.mxu0 0.0
  %50 = vmatpush1.msra.mxu0 %v35
  %51 = vmatprep.subr.mxu0 0.0
  %52 = vmatpush1.msra.mxu0 %v34
  %53 = vmatprep.subr.mxu0 0.0
  %54 = vmatpush1.msra.mxu0 %v33
  %55 = vmatprep.subr.mxu0 0.0
  %56 = vmatpush1.msra.mxu0 %v32
  %57 = vmatprep.subr.mxu0 0.0
  %58 = vmatpush1.msra.mxu0 %v31
  %59 = vmatprep.subr.mxu0 0.0
  %60 = vmatpush1.msra.mxu0 %v30
  %61 = vmatprep.subr.mxu0 0.0
  %62 = vmatpush1.msra.mxu0 %v29
  %63 = vmatprep.subr.mxu0 0.0
  %64 = vmatpush1.msra.mxu0 %v28
  %65 = vmatprep.subr.mxu0 0.0
  %66 = vmatpush1.msra.mxu0 %v27
  %67 = vmatprep.subr.mxu0 0.0
  %68 = vmatpush1.msra.mxu0 %v26
  %69 = vmatprep.subr.mxu0 0.0
  %70 = vmatpush1.msra.mxu0 %v25
  %71 = vmatprep.subr.mxu0 0.0
  %72 = vmatpush1.msra.mxu0 %v24
  %73 = vmatprep.subr.mxu0 0.0
  %74 = vmatpush1.msra.mxu0 %v23
  %75 = vmatprep.subr.mxu0 0.0
  %76 = vmatpush1.msra.mxu0 %v22
  %77 = vmatprep.subr.mxu0 0.0
  %78 = vmatpush2.msra.mxu0 0.0
  %79 = vmatprep.subr.mxu0 0.0
  %80 = vmatpush2.msra.mxu0 0.0
  %81 = vmatprep.subr.mxu0 0.0
  %82 = vmatpush2.msra.mxu0 0.0
  %83 = vmatprep.subr.mxu0 0.0
  %84 = vmatpush2.msra.mxu0 0.0
  %85 = vmatprep.subr.mxu0 0.0
  %86 = vmatpush2.msra.mxu0 0.0
  %87 = vmatprep.subr.mxu0 0.0
  %88 = vmatpush2.msra.mxu0 0.0
  %89 = vmatprep.subr.mxu0 0.0
  %90 = vmatpush2.msra.mxu0 0.0
  %91 = vmatprep.subr.mxu0 0.0
  %92 = vmatpush2.msra.mxu0 0.0
  %93 = vmatprep.subr.mxu0 0.0
  %94 = vmatpush2.msra.mxu0 0.0
  %95 = vmatprep.subr.mxu0 0.0
  %96 = vmatpush2.msra.mxu0 0.0
  %97 = vmatprep.subr.mxu0 0.0
  %98 = vmatpush2.msra.mxu0 0.0
  %99 = vmatprep.subr.mxu0 0.0
  %100 = vmatpush2.msra.mxu0 0.0
  %101 = vmatprep.subr.mxu0 0.0
  %102 = vmatpush2.msra.mxu0 0.0
  %103 = vmatprep.subr.mxu0 0.0
  %104 = vmatpush2.msra.mxu0 0.0
  %105 = vmatprep.subr.mxu0 0.0
  %106 = vmatpush2.msra.mxu0 0.0
  %107 = vmatprep.subr.mxu0 0.0
  %108 = vmatpush2.msra.mxu0 0.0
  %109 = vmatprep.mubr.f32.mxu0 0.0
  %110 = vmatmul.mubr.f32.gmra.mxu0 %v21
  %v111 = vpop.f32.mrf.mxu0
  %v112 = vadd.f32 %v43, %v111
  %v113 = vpop.f32.mrf.mxu0
  %114 = vdwg.mxu0
  %v115 = vmax.f32 %v112, 0.0
  %v116 = vld [vmem:[%s3] sm:$0xff]
  %v117 = vld [vmem:[%s3 + $0x8] sm:$0xff]
  %v118 = vld [vmem:[%s3 + $0x10] sm:$0xff]
  %v119 = vld [vmem:[%s3 + $0x18] sm:$0xff]
  %v120 = vld [vmem:[%s3 + $0x20] sm:$0xff]
  %v121 = vld [vmem:[%s3 + $0x28] sm:$0xff]
  %v122 = vld [vmem:[%s3 + $0x30] sm:$0xff]
  %v123 = vld [vmem:[%s3 + $0x38] sm:$0xff]
  %v124 = vld [vmem:[%s3 + $0x40] sm:$0xff]
  %v125 = vld [vmem:[%s3 + $0x48] sm:$0xff]
  %v126 = vld [vmem:[%s3 + $0x50] sm:$0xff]
  %v127 = vld [vmem:[%s3 + $0x58] sm:$0xff]
  %v128 = vld [vmem:[%s3 + $0x60] sm:$0xff]
  %v129 = vld [vmem:[%s3 + $0x68] sm:$0xff]
  %v130 = vld [vmem:[%s3 + $0x70] sm:$0xff]
  %v131 = vld [vmem:[%s3 + $0x78] sm:$0xff]
  %v132 = vld [vmem:[%s4] sm:$0x1]
  %v134 = vlaneseq
  %v135 = vshrl.u32 %v134, 7
  %v136 = vsub.s32 0, %v135
  %v137 = vrot.slane %v132, %v136
  %139 = vmatprep.subr.mxu0 0.0
  %140 = vmatpush1.msra.mxu0 %v131
  %141 = vmatprep.subr.mxu0 0.0
  %142 = vmatpush1.msra.mxu0 %v130
  %143 = vmatprep.subr.mxu0 0.0
  %144 = vmatpush1.msra.mxu0 %v129
  %145 = vmatprep.subr.mxu0 0.0
  %146 = vmatpush1.msra.mxu0 %v128
  %147 = vmatprep.subr.mxu0 0.0
  %148 = vmatpush1.msra.mxu0 %v127
  %149 = vmatprep.subr.mxu0 0.0
  %150 = vmatpush1.msra.mxu0 %v126
  %151 = vmatprep.subr.mxu0 0.0
  %152 = vmatpush1.msra.mxu0 %v125
  %153 = vmatprep.subr.mxu0 0.0
  %154 = vmatpush1.msra.mxu0 %v124
  %155 = vmatprep.subr.mxu0 0.0
  %156 = vmatpush1.msra.mxu0 %v123
  %157 = vmatprep.subr.mxu0 0.0
  %158 = vmatpush1.msra.mxu0 %v122
  %159 = vmatprep.subr.mxu0 0.0
  %160 = vmatpush1.msra.mxu0 %v121
  %161 = vmatprep.subr.mxu0 0.0
  %162 = vmatpush1.msra.mxu0 %v120
  %163 = vmatprep.subr.mxu0 0.0
  %164 = vmatpush1.msra.mxu0 %v119
  %165 = vmatprep.subr.mxu0 0.0
  %166 = vmatpush1.msra.mxu0 %v118
  %167 = vmatprep.subr.mxu0 0.0
  %168 = vmatpush1.msra.mxu0 %v117
  %169 = vmatprep.subr.mxu0 0.0
  %170 = vmatpush1.msra.mxu0 %v116
  %171 = vmatprep.subr.mxu0 0.0
  %172 = vmatpush2.msra.mxu0 0.0
  %173 = vmatprep.subr.mxu0 0.0
  %174 = vmatpush2.msra.mxu0 0.0
  %175 = vmatprep.subr.mxu0 0.0
  %176 = vmatpush2.msra.mxu0 0.0
  %177 = vmatprep.subr.mxu0 0.0
  %178 = vmatpush2.msra.mxu0 0.0
  %179 = vmatprep.subr.mxu0 0.0
  %180 = vmatpush2.msra.mxu0 0.0
  %181 = vmatprep.subr.mxu0 0.0
  %182 = vmatpush2.msra.mxu0 0.0
  %183 = vmatprep.subr.mxu0 0.0
  %184 = vmatpush2.msra.mxu0 0.0
  %185 = vmatprep.subr.mxu0 0.0
  %186 = vmatpush2.msra.mxu0 0.0
  %187 = vmatprep.subr.mxu0 0.0
  %188 = vmatpush2.msra.mxu0 0.0
  %189 = vmatprep.subr.mxu0 0.0
  %190 = vmatpush2.msra.mxu0 0.0
  %191 = vmatprep.subr.mxu0 0.0
  %192 = vmatpush2.msra.mxu0 0.0
  %193 = vmatprep.subr.mxu0 0.0
  %194 = vmatpush2.msra.mxu0 0.0
  %195 = vmatprep.subr.mxu0 0.0
  %196 = vmatpush2.msra.mxu0 0.0
  %197 = vmatprep.subr.mxu0 0.0
  %198 = vmatpush2.msra.mxu0 0.0
  %199 = vmatprep.subr.mxu0 0.0
  %200 = vmatpush2.msra.mxu0 0.0
  %201 = vmatprep.subr.mxu0 0.0
  %202 = vmatpush2.msra.mxu0 0.0
  %203 = vmatprep.mubr.f32.mxu0 0.0
  %204 = vmatmul.mubr.f32.gmra.mxu0 %v115
  %v205 = vpop.f32.mrf.mxu0
  %v206 = vadd.f32 %v137, %v205
  %v207 = vpop.f32.mrf.mxu0
  %208 = vdwg.mxu0
  %209 = vst [vmem:[%s5] sm:$0xff] %v206
  // Predicated region
  $region22: #{custom_network_forward.1} parent=0 // pred_check
    _
  $region23: #{custom_network_forward.1} parent=0 // pred_check_branch
    %211 = sbr.rel (0) target = $region25
  $region24: #{custom_network_forward.1} parent=0 // pred_region
    _
  $region25: #{custom_network_forward.1} parent=0 // pred_fallthru
    _
  // Predicated region
  $region26: #{custom_network_forward.1} parent=0 // pred_check
    _
  $region27: #{custom_network_forward.1} parent=0 // pred_check_branch
    %213 = sbr.rel (0) target = $region29
  $region28: #{custom_network_forward.1} parent=0 // pred_region
    _
  $region29: #{custom_network_forward.1} parent=0 // pred_fallthru
    _

</llo_original>
